<compile_context>
chip_gen: v6e
topology: v6e:2x2x1
jax: 0.10.0
libtpu: 0.0.40
codegen_flags: <defaults>
</compile_context>

<pallas_src>
import functools

import numpy as np
import jax
import jax.numpy as jnp
from jax.experimental import pallas as pl
from jax.experimental.pallas import tpu as pltpu


# ---------------------------------------------------------------------------
# Kernel: bilinear upsample + softmax + CE partial sums + Lovasz error maps
# ---------------------------------------------------------------------------
def _pixel_kernel(my_ref, mxt_ref, tgt_ref, pred_ref,     # inputs
                  err_ref, l1_ref,                        # outputs
                  u_scr,                                  # VMEM scratch
                  *, num_classes, ignore_index):
    C = num_classes
    TH = my_ref.shape[0]
    h = my_ref.shape[1]
    W = mxt_ref.shape[1]
    hi = pl.program_id(1)

    # ---- column upsample: one big MXU matmul, cached per batch element ----
    @pl.when(hi == 0)
    def _():
        u = jnp.dot(pred_ref[0], mxt_ref[...],
                    preferred_element_type=jnp.float32)          # (C*h, W)
        u_scr[...] = u.reshape(C, h, W)

    # ---- row upsample: single batched dot over the class axis ----
    my_b = jnp.broadcast_to(my_ref[...], (C, TH, h))
    logits = jax.lax.dot_general(
        my_b, u_scr[...],
        dimension_numbers=(((2,), (1,)), ((0,), (0,))),
        preferred_element_type=jnp.float32)                      # (C, TH, W)

    tgt = tgt_ref[0]                                             # (TH, W) int32
    vf = (tgt != ignore_index).astype(jnp.float32)               # valid mask

    # One-hot of the target class; ignored pixels (tgt == 255 >= C) give all-zero rows.
    cls = jax.lax.broadcasted_iota(jnp.int32, (C, TH, W), 0)
    fg = (tgt[None] == cls).astype(jnp.float32)                  # (C, TH, W)

    # ---- softmax over the class axis (vectorized, numerically stable) ----
    m = jnp.max(logits, axis=0)                                  # (TH, W)
    e = jnp.exp(logits - m[None])                                # (C, TH, W)
    s = jnp.sum(e, axis=0)                                       # (TH, W)
    ly = jnp.sum(logits * fg, axis=0)                            # true-class logit

    inv_s = pl.reciprocal(s, approx=True)                        # EUP slot, ~free

    # CE: -log softmax(logits)[target] = m + log(sum exp) - logit_target; mask ignored.
    nll = (m + jnp.log(s) - ly) * vf

    # loss1 partial sums: reduce only over the sublane axis -> (2, W) per tile.
    l1_ref[0, 0] = jnp.concatenate(
        [jnp.sum(nll, axis=0, keepdims=True),
         jnp.sum(vf, axis=0, keepdims=True)], axis=0)            # (2, W)

    # Lovasz per-class error maps: |1{target==c} - p_c|, zero at ignored pixels.
    probs = e * inv_s[None]
    err_ref[0] = jnp.abs(fg - probs) * vf[None]


# ---------------------------------------------------------------------------
# Helpers
# ---------------------------------------------------------------------------
def _interp_matrix(out_size, in_size):
    """Bilinear interpolation matrix, align_corners=True (exact)."""
    M = np.zeros((out_size, in_size), dtype=np.float32)
    if out_size == 1:
        src = np.zeros((1,), dtype=np.float64)
    else:
        src = np.arange(out_size, dtype=np.float64) * (in_size - 1) / (out_size - 1)
    i0 = np.clip(np.floor(src).astype(np.int64), 0, in_size - 1)
    i1 = np.minimum(i0 + 1, in_size - 1)
    frac = (src - i0).astype(np.float32)
    rows = np.arange(out_size)
    np.add.at(M, (rows, i0), 1.0 - frac)
    np.add.at(M, (rows, i1), frac)
    return M


def _pick_row_tile(H, W, C, h, budget_bytes=48 * 1024 * 1024):
    """Largest row tile TH dividing H, satisfying the (8,·) block rule, fitting VMEM."""
    cands = [t for t in range(H, 0, -1) if H % t == 0 and (t % 8 == 0 or t == H)]
    for t in cands:
        vmem = 4 * (C * h * W              # u_scr (column-upsampled logits cache)
                    + 8 * C * t * W        # logits/exps/probs/fg + 2x buffered err block
                    + 4 * t * W)           # target/valid/nll planes + l1 block
        if vmem <= budget_bytes:
            return t
    return cands[-1]


# ---------------------------------------------------------------------------
# Wrapper: loss1 (CE, mean over valid) + loss2 (Lovasz-softmax)
# ---------------------------------------------------------------------------
def criterion_ohem_dsn2(target, preds, ignore_index=255):
    pred = preds[0]                                  # DSN2 spec only consumes preds[0]
    N, H, W = target.shape
    _, C, h, w = pred.shape
    TH = _pick_row_tile(H, W, C, h)
    HT = H // TH

    My = jnp.asarray(_interp_matrix(H, h))                       # (H, h)
    MxT = jnp.asarray(_interp_matrix(W, w).T)                    # (w, W)
    pred_r = pred.reshape(N, C * h, w).astype(jnp.float32)       # flatten classes: 1 big matmul
    tgt = target.astype(jnp.int32)

    kernel = functools.partial(_pixel_kernel, num_classes=C, ignore_index=ignore_index)
    err, l1part = pl.pallas_call(
        kernel,
        out_shape=(jax.ShapeDtypeStruct((N, C, H, W), jnp.float32),
                   jax.ShapeDtypeStruct((N, HT, 2, W), jnp.float32)),
        grid=(N, HT),
        in_specs=[
            pl.BlockSpec((TH, h), lambda n, hi: (hi, 0)),           # My row tile
            pl.BlockSpec((w, W), lambda n, hi: (0, 0)),             # Mx^T
            pl.BlockSpec((1, TH, W), lambda n, hi: (n, hi, 0)),     # target row tile
            pl.BlockSpec((1, C * h, w), lambda n, hi: (n, 0, 0)),   # preds[0] (C*h, w)
        ],
        out_specs=(
            pl.BlockSpec((1, C, TH, W), lambda n, hi: (n, 0, hi, 0)),   # Lovasz error maps
            pl.BlockSpec((1, 1, 2, W), lambda n, hi: (n, hi, 0, 0)),    # loss1 partial sums
        ),
        scratch_shapes=[
            pltpu.VMEM((C, h, W), jnp.float32),      # column-upsampled logits (cached per n)
        ],
        compiler_params=pltpu.CompilerParams(
            dimension_semantics=("parallel", "arbitrary"),
            vmem_limit_bytes=64 * 1024 * 1024,
        ),
    )(My, MxT, tgt, pred_r)

    # ---- loss1: mean CE over non-ignored pixels (guard against zero valid pixels) ----
    nll_sum = jnp.sum(l1part[:, :, 0, :])
    valid_cnt = jnp.sum(l1part[:, :, 1, :])
    loss1 = jnp.where(valid_cnt > 0, nll_sum / jnp.maximum(valid_cnt, 1.0), 0.0)

    # ---- loss2: Lovasz-softmax (classes='present', per_image=False) ----
    # TODO(synk): global per-class descending sort + permutation gather + cumsum has no
    # clean Pallas TPU primitive; done here with jnp.argsort / take_along_axis / cumsum.
    P = N * H * W
    errs = err.transpose(1, 0, 2, 3).reshape(C, P)                       # (C, P)
    fg = (tgt[None] == jnp.arange(C, dtype=jnp.int32)[:, None, None, None]).astype(jnp.float32)
    fg = fg.reshape(C, P)                                                # ignored pixels -> 0
    present = jnp.sum(fg, axis=1) > 0

    order = jnp.argsort(-errs, axis=1)                                   # descending errors
    errs_sorted = jnp.take_along_axis(errs, order, axis=1)
    fg_sorted = jnp.take_along_axis(fg, order, axis=1)

    gts = jnp.sum(fg_sorted, axis=1, keepdims=True)
    intersection = gts - jnp.cumsum(fg_sorted, axis=1)
    union = gts + jnp.cumsum(1.0 - fg_sorted, axis=1)
    jaccard = 1.0 - intersection / union
    grad = jnp.concatenate([jaccard[:, :1], jaccard[:, 1:] - jaccard[:, :-1]], axis=1)
    per_class = jnp.sum(errs_sorted * grad, axis=1)

    n_present = jnp.sum(present.astype(jnp.float32))
    loss2 = jnp.where(
        n_present > 0,
        jnp.sum(jnp.where(present, per_class, 0.0)) / jnp.maximum(n_present, 1.0),
        0.0)

    return loss1 + loss2


if __name__ == "__main__":
    key = jax.random.PRNGKey(0)
    N, C = 2, 4          # batch, num classes
    H = W = 16           # target spatial size
    h = wd = 8           # prediction spatial size (upsampled 2x inside the kernel)

    k1, k2, k3 = jax.random.split(key, 3)
    pred1 = jax.random.normal(k1, (N, C, h, wd), dtype=jnp.float32)   # preds[0], NCHW
    pred2 = jax.random.normal(k2, (N, C, h, wd), dtype=jnp.float32)   # preds[1] (unused by DSN2)
    target = jax.random.randint(k3, (N, H, W), 0, C, dtype=jnp.int32)
    target = target.at[:, ::5, ::7].set(255)   # sprinkle some ignore_index pixels

    loss = criterion_ohem_dsn2(target, (pred1, pred2), ignore_index=255)
    jax.block_until_ready(loss)
    print("KERNEL_OK")
</pallas_src>

<mosaic_0001>
module attributes {stable_mosaic.version = 11 : i64} {
  func.func @_pixel_kernel(%arg0: i32, %arg1: i32, %arg2: memref<16x8xf32, #tpu.memory_space<vmem>>, %arg3: memref<8x16xf32, #tpu.memory_space<vmem>>, %arg4: memref<1x16x16xi32, #tpu.memory_space<vmem>>, %arg5: memref<1x32x8xf32, #tpu.memory_space<vmem>>, %arg6: memref<1x4x16x16xf32, #tpu.memory_space<vmem>>, %arg7: memref<1x1x2x16xf32, #tpu.memory_space<vmem>>, %arg8: memref<4x8x16xf32, #tpu.memory_space<vmem>>) attributes {dimension_semantics = [#tpu.dimension_semantics<parallel>, #tpu.dimension_semantics<arbitrary>], iteration_bounds = array<i64: 2, 1>, scalar_prefetch = 0 : i64, scratch_operands = 1 : i64, tpu.core_type = #tpu.core_type<tc>, window_params = [{transform_indices = @transform_0, window_bounds = array<i64: 16, 8>}, {pipeline_mode = #tpu.pipeline_mode<synchronous>, transform_indices = @transform_1, window_bounds = array<i64: 8, 16>}, {transform_indices = @transform_2, window_bounds = array<i64: 1, 16, 16>}, {transform_indices = @transform_3, window_bounds = array<i64: 1, 32, 8>}, {transform_indices = @transform_4, window_bounds = array<i64: 1, 4, 16, 16>}, {transform_indices = @transform_5, window_bounds = array<i64: 1, 1, 2, 16>}]} {
    %c0_i32 = arith.constant 0 : i32
    %0 = arith.cmpi eq, %arg1, %c0_i32 : i32
    %1 = arith.extui %0 : i1 to i32
    %c0_i32_0 = arith.constant 0 : i32
    %2 = arith.cmpi ne, %1, %c0_i32_0 : i32
    scf.if %2 {
      %c0_21 = arith.constant 0 : index
      %c0_22 = arith.constant 0 : index
      %c0_23 = arith.constant 0 : index
      %52 = vector.load %arg5[%c0_21, %c0_22, %c0_23] : memref<1x32x8xf32, #tpu.memory_space<vmem>>, vector<1x32x8xf32>
      %53 = vector.shape_cast %52 : vector<1x32x8xf32> to vector<32x8xf32>
      %c0_24 = arith.constant 0 : index
      %c0_25 = arith.constant 0 : index
      %54 = vector.load %arg3[%c0_24, %c0_25] : memref<8x16xf32, #tpu.memory_space<vmem>>, vector<8x16xf32>
      %cst_26 = arith.constant dense<0.000000e+00> : vector<32x16xf32>
      %55 = tpu.matmul %53, %54, %cst_26 {dimension_numbers = #tpu.dot_dimension_numbers<[1], [0], [0], [1], [0, 0, 1, 1], [], []>} : vector<32x8xf32>, vector<8x16xf32>, vector<32x16xf32> -> vector<32x16xf32>
      %56 = vector.shape_cast %55 : vector<32x16xf32> to vector<4x8x16xf32>
      %c0_27 = arith.constant 0 : index
      %c0_28 = arith.constant 0 : index
      %c0_29 = arith.constant 0 : index
      %57 = vector.load %arg8[%c0_27, %c0_28, %c0_29] : memref<4x8x16xf32, #tpu.memory_space<vmem>>, vector<4x8x16xf32>
      tpu.vector_store %arg8[%c0_27, %c0_28, %c0_29], %56 {strides = array<i32>} : memref<4x8x16xf32, #tpu.memory_space<vmem>>, vector<4x8x16xf32>,
    } else {
    }
    %c0 = arith.constant 0 : index
    %c0_1 = arith.constant 0 : index
    %3 = vector.load %arg2[%c0, %c0_1] : memref<16x8xf32, #tpu.memory_space<vmem>>, vector<16x8xf32>
    %4 = vector.shape_cast %3 : vector<16x8xf32> to vector<1x16x8xf32>
    %5 = vector.broadcast %4 : vector<1x16x8xf32> to vector<4x16x8xf32>
    %c0_2 = arith.constant 0 : index
    %c0_3 = arith.constant 0 : index
    %c0_4 = arith.constant 0 : index
    %6 = vector.load %arg8[%c0_2, %c0_3, %c0_4] : memref<4x8x16xf32, #tpu.memory_space<vmem>>, vector<4x8x16xf32>
    %cst = arith.constant dense<0.000000e+00> : vector<4x16x16xf32>
    %7 = tpu.matmul %5, %6, %cst {dimension_numbers = #tpu.dot_dimension_numbers<[2], [1], [1], [2], [0, 0, 0, 1, 1, 2], [0], [0]>} : vector<4x16x8xf32>, vector<4x8x16xf32>, vector<4x16x16xf32> -> vector<4x16x16xf32>
    %c0_5 = arith.constant 0 : index
    %c0_6 = arith.constant 0 : index
    %c0_7 = arith.constant 0 : index
    %8 = vector.load %arg4[%c0_5, %c0_6, %c0_7] : memref<1x16x16xi32, #tpu.memory_space<vmem>>, vector<1x16x16xi32>
    %9 = vector.shape_cast %8 : vector<1x16x16xi32> to vector<16x16xi32>
    %c255_i32 = arith.constant 255 : i32
    %10 = vector.broadcast %c255_i32 : i32 to vector<16x16xi32>
    %11 = arith.cmpi ne, %9, %10 : vector<16x16xi32>
    %12 = arith.extui %11 : vector<16x16xi1> to vector<16x16xi32>
    %13 = arith.sitofp %12 : vector<16x16xi32> to vector<16x16xf32>
    %14 = tpu.iota {dimensions = array<i32: 0>} : vector<4x16x16xi32>
    %15 = vector.shape_cast %9 : vector<16x16xi32> to vector<1x16x16xi32>
    %16 = vector.broadcast %15 : vector<1x16x16xi32> to vector<4x16x16xi32>
    %17 = arith.cmpi eq, %16, %14 : vector<4x16x16xi32>
    %18 = arith.extui %17 : vector<4x16x16xi1> to vector<4x16x16xi32>
    %19 = arith.sitofp %18 : vector<4x16x16xi32> to vector<4x16x16xf32>
    %cst_8 = arith.constant dense<0xFF800000> : vector<16x16xf32>
    %20 = vector.multi_reduction <maximumf>, %7, %cst_8 [0] : vector<4x16x16xf32> to vector<16x16xf32>
    %21 = vector.shape_cast %20 : vector<16x16xf32> to vector<1x16x16xf32>
    %22 = vector.broadcast %21 : vector<1x16x16xf32> to vector<4x16x16xf32>
    %23 = arith.subf %7, %22 : vector<4x16x16xf32>
    %24 = math.exp %23 : vector<4x16x16xf32>
    %cst_9 = arith.constant dense<0.000000e+00> : vector<16x16xf32>
    %25 = vector.multi_reduction <add>, %24, %cst_9 [0] : vector<4x16x16xf32> to vector<16x16xf32>
    %26 = arith.mulf %7, %19 : vector<4x16x16xf32>
    %cst_10 = arith.constant dense<0.000000e+00> : vector<16x16xf32>
    %27 = vector.multi_reduction <add>, %26, %cst_10 [0] : vector<4x16x16xf32> to vector<16x16xf32>
    %28 = tpu.reciprocal %25 {approx = true} : vector<16x16xf32> -> vector<16x16xf32>
    %29 = math.log %25 : vector<16x16xf32>
    %30 = arith.addf %20, %29 : vector<16x16xf32>
    %31 = arith.subf %30, %27 : vector<16x16xf32>
    %32 = arith.mulf %31, %13 : vector<16x16xf32>
    %cst_11 = arith.constant dense<0.000000e+00> : vector<16xf32>
    %33 = vector.multi_reduction <add>, %32, %cst_11 [0] : vector<16x16xf32> to vector<16xf32>
    %34 = vector.shape_cast %33 : vector<16xf32> to vector<1x16xf32>
    %cst_12 = arith.constant dense<0.000000e+00> : vector<16xf32>
    %35 = vector.multi_reduction <add>, %13, %cst_12 [0] : vector<16x16xf32> to vector<16xf32>
    %36 = vector.shape_cast %35 : vector<16xf32> to vector<1x16xf32>
    %37 = tpu.concatenate %34, %36 in 0 : vector<1x16xf32>, vector<1x16xf32> -> vector<2x16xf32>
    %c0_13 = arith.constant 0 : index
    %c0_14 = arith.constant 0 : index
    %c0_15 = arith.constant 0 : index
    %c0_16 = arith.constant 0 : index
    %38 = vector.load %arg7[%c0_13, %c0_14, %c0_15, %c0_16] : memref<1x1x2x16xf32, #tpu.memory_space<vmem>>, vector<1x1x2x16xf32>
    %39 = vector.shape_cast %38 : vector<1x1x2x16xf32> to vector<2x16xf32>
    %40 = vector.shape_cast %37 : vector<2x16xf32> to vector<1x1x2x16xf32>
    tpu.vector_store %arg7[%c0_13, %c0_14, %c0_15, %c0_16], %40 {strides = array<i32>} : memref<1x1x2x16xf32, #tpu.memory_space<vmem>>, vector<1x1x2x16xf32>,
    %41 = vector.shape_cast %28 : vector<16x16xf32> to vector<1x16x16xf32>
    %42 = vector.broadcast %41 : vector<1x16x16xf32> to vector<4x16x16xf32>
    %43 = arith.mulf %24, %42 : vector<4x16x16xf32>
    %44 = arith.subf %19, %43 : vector<4x16x16xf32>
    %45 = math.absf %44 : vector<4x16x16xf32>
    %46 = vector.shape_cast %13 : vector<16x16xf32> to vector<1x16x16xf32>
    %47 = vector.broadcast %46 : vector<1x16x16xf32> to vector<4x16x16xf32>
    %48 = arith.mulf %45, %47 : vector<4x16x16xf32>
    %c0_17 = arith.constant 0 : index
    %c0_18 = arith.constant 0 : index
    %c0_19 = arith.constant 0 : index
    %c0_20 = arith.constant 0 : index
    %49 = vector.load %arg6[%c0_17, %c0_18, %c0_19, %c0_20] : memref<1x4x16x16xf32, #tpu.memory_space<vmem>>, vector<1x4x16x16xf32>
    %50 = vector.shape_cast %49 : vector<1x4x16x16xf32> to vector<4x16x16xf32>
    %51 = vector.shape_cast %48 : vector<4x16x16xf32> to vector<1x4x16x16xf32>
    tpu.vector_store %arg6[%c0_17, %c0_18, %c0_19, %c0_20], %51 {strides = array<i32>} : memref<1x4x16x16xf32, #tpu.memory_space<vmem>>, vector<1x4x16x16xf32>,
    return
  }
  func.func @transform_0(%arg0: i32, %arg1: i32) -> (i32, i32) {
    %c0_i32 = arith.constant 0 : i32
    %c0_i32_0 = arith.constant 0 : i32
    return %arg1, %c0_i32 : i32, i32
  }
  func.func @transform_1(%arg0: i32, %arg1: i32) -> (i32, i32) {
    %c0_i32 = arith.constant 0 : i32
    %c0_i32_0 = arith.constant 0 : i32
    %c0_i32_1 = arith.constant 0 : i32
    return %c0_i32, %c0_i32_0 : i32, i32
  }
  func.func @transform_2(%arg0: i32, %arg1: i32) -> (i32, i32, i32) {
    %c0_i32 = arith.constant 0 : i32
    %c0_i32_0 = arith.constant 0 : i32
    return %arg0, %arg1, %c0_i32 : i32, i32, i32
  }
  func.func @transform_3(%arg0: i32, %arg1: i32) -> (i32, i32, i32) {
    %c0_i32 = arith.constant 0 : i32
    %c0_i32_0 = arith.constant 0 : i32
    %c0_i32_1 = arith.constant 0 : i32
    return %arg0, %c0_i32, %c0_i32_0 : i32, i32, i32
  }
  func.func @transform_4(%arg0: i32, %arg1: i32) -> (i32, i32, i32, i32) {
    %c0_i32 = arith.constant 0 : i32
    %c0_i32_0 = arith.constant 0 : i32
    %c0_i32_1 = arith.constant 0 : i32
    return %arg0, %c0_i32, %arg1, %c0_i32_0 : i32, i32, i32, i32
  }
  func.func @transform_5(%arg0: i32, %arg1: i32) -> (i32, i32, i32, i32) {
    %c0_i32 = arith.constant 0 : i32
    %c0_i32_0 = arith.constant 0 : i32
    %c0_i32_1 = arith.constant 0 : i32
    return %arg0, %arg1, %c0_i32, %c0_i32_0 : i32, i32, i32, i32
  }
}

</mosaic_0001>

<llo_original>
// kernel: tpu_custom_call.1
$region0: #{tpu_custom_call.1}
  #allocation0 [shape = 'u32[]', space=smem, size = 0x4, offset = 0x4, fixed_abs, tag = 'smem constant byte address 0x4 - core index']
  #allocation1 [shape = 'u32[144,128]{1,0:T(1,128)}', space=vmem, size = 0x12000, scoped, tag = 'internal scratch']
  #allocation2 [shape = 'f32[4,8,16]{2,1,0:T(8,128)}', space=vmem, size = 0x4000, scoped, tag = 'scratch operand']
  %s0 = inlined_call_operand.vmem [shape: f32[16,8], index: 0, kind: input, shape index: {}]
  %s1 = inlined_call_operand.vmem [shape: f32[8,16], index: 1, kind: input, shape index: {}]
  %s2 = inlined_call_operand.vmem [shape: s32[2,16,16], index: 2, kind: input, shape index: {}]
  %s3 = inlined_call_operand.vmem [shape: f32[2,32,8], index: 3, kind: input, shape index: {}]
  %s4 = inlined_call_operand.hbm [shape: f32[2,4,16,16], index: 4, kind: output, shape index: {0}]
  %s5 = inlined_call_operand.hbm [shape: f32[2,1,2,16], index: 5, kind: output, shape index: {1}]
  %6 = xla_tuple %s4, %s5
  %s7 = sld [smem:[#allocation0]]
  $region61: #{tpu_custom_call.1} parent=0
    _
  %s9 = ssub.s32 1, %s7
  %s10 = scalar_select 0, %s9, %s7
  $region1: #{tpu_custom_call.1} parent=0
    #allocation3 [shape = 'u8[65536]{0}', space=vmem, size = 0x10000, scoped, tag = 'output window, operand 0']
    #allocation4 [shape = 's32[2]{0}', space=sflag, size = 0x8, scoped, tag = 'scoped memory for tpu_custom_call.1']
    #allocation5 [shape = 'u8[2048]{0}', space=vmem, size = 0x800, scoped, tag = 'output window, operand 1']
    #allocation6 [shape = 's32[2]{0}', space=sflag, size = 0x8, scoped, tag = 'scoped memory for tpu_custom_call.1']
    %11 = vsyncpa [#allocation4], 0
    %s12 = scalar_lea.sflag [#allocation4], 1
    %13 = vsyncpa %s12, 0
    %14 = vsyncpa [#allocation6], 0
    %s15 = scalar_lea.sflag [#allocation6], 1
    %16 = vsyncpa %s15, 0
    loop: start=0, step=1, limit=4
    $region2: #{tpu_custom_call.1} parent=1 // loop_pre_header
      _
    $region3: #{tpu_custom_call.1} parent=1 // loop_header
      %s18 = sphi 0, %s22
      %p19 = scmp.ge.s32.totalorder %s18, 4
      %s25 = sphi 0, %s37
      %s26 = sphi 0, %s33
      %s27 = sphi 0, %s25
      %s28 = sphi 0, %s26
      %s29 = sphi 0, %s27
      %s30 = sphi 0, %s28
      %s40 = sphi 0, %s42
      %s43 = sphi 0, %s40
      %s44 = sphi 0, %s43
      %s60 = sphi 0, %s44
      %s64 = sphi 0, %s64
      %s66 = sphi 0, %s64
      %s67 = sphi 0, %s66
      %s81 = sphi 0, %s67
      %s89 = sphi 0, %s91
      %s92 = sphi 0, %s89
      %s93 = sphi 0, %s92
      %s109 = sphi 0, %s93
      %s115 = sphi 0, %s117
      %s118 = sphi 0, %s115
      %s119 = sphi 0, %s118
      %s135 = sphi 0, %s119
      %s143 = sphi 0, %s145
      %s146 = sphi 0, %s143
      %s147 = sphi 0, %s146
      %s163 = sphi 0, %s147
      %s171 = sphi 0, %s173
      %s174 = sphi 0, %s171
      %s175 = sphi 0, %s174
      %s191 = sphi 0, %s175
    $region4: #{tpu_custom_call.1} parent=1 // loop_header_branch
      %21 = sbr.rel (%p19) target = $region8
    $region5: #{tpu_custom_call.1} parent=1 // loop_body
      %s23 = ssub.s32 %s18, 1
      %s24 = ssub.s32 %s18, 2
      %s31 = sadd.s32 1, %s26
      %p32 = scmp.ge.s32.totalorder %s31, 1
      %s33 = scalar_select %p32, 0, %s31
      %s34 = sadd.s32 1, %s25
      %s35 = scalar_select %p32, %s34, %s25
      %p36 = scmp.ge.s32.totalorder %s35, 2
      %s37 = scalar_select %p36, 0, %s35
      %s38 = ssub.s32 %s26, %s33
      %p39 = scmp.eq.s32.totalorder %s38, 0
      %s41 = sadd.s32 %s40, 1
      %s42 = scalar_select %p39, %s40, %s41
      %p45 = pneg %p39
      %p46 = scmp.eq.s32.totalorder %s18, 1
      %p47 = por %p45, %p46
      %p48 = scmp.ne.s32.totalorder %s40, %s43
      %p49 = scmp.eq.s32.totalorder %s18, 0
      %p50 = por %p48, %p49
      %p51 = scmp.ne.s32.totalorder %s40, %s43
      %p52 = scmp.eq.s32.totalorder %s23, 1
      %p53 = por %p51, %p52
      %p54 = scmp.ne.s32.totalorder %s43, %s44
      %p55 = scmp.eq.s32.totalorder %s23, 0
      %p56 = por %p54, %p55
      %p57 = scmp.ne.s32.totalorder %s43, %s44
      %p58 = scmp.eq.s32.totalorder %s24, 1
      %p59 = por %p57, %p58
      %p61 = scmp.ne.s32.totalorder %s44, %s60
      %p62 = scmp.eq.s32.totalorder %s24, 0
      %p63 = por %p61, %p62
      %s65 = sadd.s32 %s64, 1
      %p68 = scmp.eq.s32.totalorder %s18, 1
      %p69 = scmp.ne.s32.totalorder %s64, %s66
      %p70 = scmp.eq.s32.totalorder %s18, 0
      %p71 = por %p69, %p70
      %p72 = scmp.ne.s32.totalorder %s64, %s66
      %p73 = scmp.eq.s32.totalorder %s23, 1
      %p74 = por %p72, %p73
      %p75 = scmp.ne.s32.totalorder %s66, %s67
      %p76 = scmp.eq.s32.totalorder %s23, 0
      %p77 = por %p75, %p76
      %p78 = scmp.ne.s32.totalorder %s66, %s67
      %p79 = scmp.eq.s32.totalorder %s24, 1
      %p80 = por %p78, %p79
      %p82 = scmp.ne.s32.totalorder %s67, %s81
      %p83 = scmp.eq.s32.totalorder %s24, 0
      %p84 = por %p82, %p83
      %s85 = ssub.s32 %s25, %s37
      %s86 = ssub.s32 %s26, %s33
      %s87 = sor.u32 %s85, %s86
      %p88 = scmp.eq.s32.totalorder %s87, 0
      %s90 = sadd.s32 %s89, 1
      %s91 = scalar_select %p88, %s89, %s90
      %p94 = pneg %p88
      %p95 = scmp.eq.s32.totalorder %s18, 1
      %p96 = por %p94, %p95
      %p97 = scmp.ne.s32.totalorder %s89, %s92
      %p98 = scmp.eq.s32.totalorder %s18, 0
      %p99 = por %p97, %p98
      %p100 = scmp.ne.s32.totalorder %s89, %s92
      %p101 = scmp.eq.s32.totalorder %s23, 1
      %p102 = por %p100, %p101
      %p103 = scmp.ne.s32.totalorder %s92, %s93
      %p104 = scmp.eq.s32.totalorder %s23, 0
      %p105 = por %p103, %p104
      %p106 = scmp.ne.s32.totalorder %s92, %s93
      %p107 = scmp.eq.s32.totalorder %s24, 1
      %p108 = por %p106, %p107
      %p110 = scmp.ne.s32.totalorder %s93, %s109
      %p111 = scmp.eq.s32.totalorder %s24, 0
      %p112 = por %p110, %p111
      %s113 = ssub.s32 %s25, %s37
      %p114 = scmp.eq.s32.totalorder %s113, 0
      %s116 = sadd.s32 %s115, 1
      %s117 = scalar_select %p114, %s115, %s116
      %p120 = pneg %p114
      %p121 = scmp.eq.s32.totalorder %s18, 1
      %p122 = por %p120, %p121
      %p123 = scmp.ne.s32.totalorder %s115, %s118
      %p124 = scmp.eq.s32.totalorder %s18, 0
      %p125 = por %p123, %p124
      %p126 = scmp.ne.s32.totalorder %s115, %s118
      %p127 = scmp.eq.s32.totalorder %s23, 1
      %p128 = por %p126, %p127
      %p129 = scmp.ne.s32.totalorder %s118, %s119
      %p130 = scmp.eq.s32.totalorder %s23, 0
      %p131 = por %p129, %p130
      %p132 = scmp.ne.s32.totalorder %s118, %s119
      %p133 = scmp.eq.s32.totalorder %s24, 1
      %p134 = por %p132, %p133
      %p136 = scmp.ne.s32.totalorder %s119, %s135
      %p137 = scmp.eq.s32.totalorder %s24, 0
      %p138 = por %p136, %p137
      %s139 = ssub.s32 %s25, %s37
      %s140 = ssub.s32 %s26, %s33
      %s141 = sor.u32 %s139, %s140
      %p142 = scmp.eq.s32.totalorder %s141, 0
      %s144 = sadd.s32 %s143, 1
      %s145 = scalar_select %p142, %s143, %s144
      %p148 = pneg %p142
      %p149 = scmp.eq.s32.totalorder %s18, 1
      %p150 = por %p148, %p149
      %p151 = scmp.ne.s32.totalorder %s143, %s146
      %p152 = scmp.eq.s32.totalorder %s18, 0
      %p153 = por %p151, %p152
      %p154 = scmp.ne.s32.totalorder %s143, %s146
      %p155 = scmp.eq.s32.totalorder %s23, 1
      %p156 = por %p154, %p155
      %p157 = scmp.ne.s32.totalorder %s146, %s147
      %p158 = scmp.eq.s32.totalorder %s23, 0
      %p159 = por %p157, %p158
      %p160 = scmp.ne.s32.totalorder %s146, %s147
      %p161 = scmp.eq.s32.totalorder %s24, 1
      %p162 = por %p160, %p161
      %p164 = scmp.ne.s32.totalorder %s147, %s163
      %p165 = scmp.eq.s32.totalorder %s24, 0
      %p166 = por %p164, %p165
      %s167 = ssub.s32 %s25, %s37
      %s168 = ssub.s32 %s26, %s33
      %s169 = sor.u32 %s167, %s168
      %p170 = scmp.eq.s32.totalorder %s169, 0
      %s172 = sadd.s32 %s171, 1
      %s173 = scalar_select %p170, %s171, %s172
      %p176 = pneg %p170
      %p177 = scmp.eq.s32.totalorder %s18, 1
      %p178 = por %p176, %p177
      %p179 = scmp.ne.s32.totalorder %s171, %s174
      %p180 = scmp.eq.s32.totalorder %s18, 0
      %p181 = por %p179, %p180
      %p182 = scmp.ne.s32.totalorder %s171, %s174
      %p183 = scmp.eq.s32.totalorder %s23, 1
      %p184 = por %p182, %p183
      %p185 = scmp.ne.s32.totalorder %s174, %s175
      %p186 = scmp.eq.s32.totalorder %s23, 0
      %p187 = por %p185, %p186
      %p188 = scmp.ne.s32.totalorder %s174, %s175
      %p189 = scmp.eq.s32.totalorder %s24, 1
      %p190 = por %p188, %p189
      %p192 = scmp.ne.s32.totalorder %s175, %s191
      %p193 = scmp.eq.s32.totalorder %s24, 0
      %p194 = por %p192, %p193
      %p195 = scmp.le.s32.totalorder 1, %s18
      %p196 = scmp.lt.s32.totalorder %s18, 3
      %p197 = pnand %p195, %p196
      %p198 = pneg %p197
      // Predicated region
      $region9: #{tpu_custom_call.1} parent=5 // pred_check
        _
      $region10: #{tpu_custom_call.1} parent=5 // pred_check_branch
        %200 = sbr.rel (%p197) target = $region12
      $region11: #{tpu_custom_call.1} parent=5 // pred_region
        %s201 = ssub.s32 %s18, 1
        // Predicated region
        $region13: #{tpu_custom_call.1} parent=11 // pred_check
          %p202 = pneg %p56
        $region14: #{tpu_custom_call.1} parent=11 // pred_check_branch
          %204 = sbr.rel (%p202) target = $region16
        $region15: #{tpu_custom_call.1} parent=11 // pred_region
          %s205 = smul.u32 2, %s28
          %p206 = scmp.lt.s32.totalorder %s205, 1
          %s207 = scalar_select %p206, %s205, 1
          %s208 = smul.addr %s207, 8
          %s209 = scalar_lea.vmem %s0, %s208
          %s210 = smul.u32 2, %s28
        $region16: #{tpu_custom_call.1} parent=11 // pred_fallthru
          _
        // Predicated region
        $region17: #{tpu_custom_call.1} parent=11 // pred_check
          %p211 = pneg %p77
        $region18: #{tpu_custom_call.1} parent=11 // pred_check_branch
          %213 = sbr.rel (%p211) target = $region20
        $region19: #{tpu_custom_call.1} parent=11 // pred_region
          _
        $region20: #{tpu_custom_call.1} parent=11 // pred_fallthru
          _
      $region12: #{tpu_custom_call.1} parent=5 // pred_fallthru
        _
      %p214 = scmp.lt.s32.totalorder %s18, 2
      // Predicated region
      $region21: #{tpu_custom_call.1} parent=5 // pred_check
        %p215 = pneg %p214
      $region22: #{tpu_custom_call.1} parent=5 // pred_check_branch
        %217 = sbr.rel (%p215) target = $region24
      $region23: #{tpu_custom_call.1} parent=5 // pred_region
        // Predicated region
        $region25: #{tpu_custom_call.1} parent=23 // pred_check
          %p218 = pneg %p99
        $region26: #{tpu_custom_call.1} parent=23 // pred_check_branch
          %220 = sbr.rel (%p218) target = $region28
        $region27: #{tpu_custom_call.1} parent=23 // pred_region
          %s221 = smul.u32 2, %s26
          %p222 = scmp.lt.s32.totalorder %s25, 1
          %s223 = scalar_select %p222, %s25, 1
          %p224 = scmp.lt.s32.totalorder %s221, 1
          %s225 = scalar_select %p224, %s221, 1
          %s226 = smul.addr %s223, 2
          %s227 = sadd.s32 %s225, %s226
          %s228 = smul.addr %s227, 8
          %s229 = scalar_lea.vmem %s2, %s228
          %s230 = smul.u32 2, %s26
        $region28: #{tpu_custom_call.1} parent=23 // pred_fallthru
          _
        // Predicated region
        $region29: #{tpu_custom_call.1} parent=23 // pred_check
          %p231 = pneg %p125
        $region30: #{tpu_custom_call.1} parent=23 // pred_check_branch
          %233 = sbr.rel (%p231) target = $region32
        $region31: #{tpu_custom_call.1} parent=23 // pred_region
          %p234 = scmp.lt.s32.totalorder %s25, 1
          %s235 = scalar_select %p234, %s25, 1
          %s236 = smul.addr %s235, 4
          %s237 = smul.addr %s236, 8
          %s238 = scalar_lea.vmem %s3, %s237
        $region32: #{tpu_custom_call.1} parent=23 // pred_fallthru
          _
      $region24: #{tpu_custom_call.1} parent=5 // pred_fallthru
        _
      %p239 = scmp.le.s32.totalorder 1, %s18
      %p240 = scmp.lt.s32.totalorder %s18, 3
      %p241 = pnand %p239, %p240
      %p242 = pneg %p241
      // Predicated region
      $region33: #{tpu_custom_call.1} parent=5 // pred_check
        _
      $region34: #{tpu_custom_call.1} parent=5 // pred_check_branch
        %244 = sbr.rel (%p241) target = $region36
      $region35: #{tpu_custom_call.1} parent=5 // pred_region
        %s245 = ssub.s32 %s18, 1
        %s246 = smul.u32 2, %s28
        %p247 = scmp.lt.s32.totalorder %s246, 1
        %s248 = scalar_select %p247, %s246, 1
        %s249 = smul.addr %s248, 8
        %s250 = scalar_lea.vmem %s0, %s249
        %p251 = pneg %p56
        %p252 = pneg %p53
        %p253 = pneg %p77
        %p254 = pneg %p74
        %s255 = smul.u32 2, %s28
        %p256 = scmp.lt.s32.totalorder %s27, 1
        %s257 = scalar_select %p256, %s27, 1
        %p258 = scmp.lt.s32.totalorder %s255, 1
        %s259 = scalar_select %p258, %s255, 1
        %s260 = smul.addr %s257, 2
        %s261 = sadd.s32 %s259, %s260
        %s262 = smul.addr %s261, 8
        %s263 = scalar_lea.vmem %s2, %s262
        %p264 = pneg %p105
        %p265 = pneg %p102
        %p266 = scmp.lt.s32.totalorder %s27, 1
        %s267 = scalar_select %p266, %s27, 1
        %s268 = smul.addr %s267, 4
        %s269 = smul.addr %s268, 8
        %s270 = scalar_lea.vmem %s3, %s269
        %p271 = pneg %p131
        %p272 = pneg %p128
        %p273 = pneg %p159
        %p274 = pneg %p156
        %s275 = sand.u32 %s146, 1
        %s276 = scalar_lea.sflag [#allocation4], %s275
        %s277 = sand.u32 %s146, 1
        %s278 = smul.addr %s277, 64
        %s279 = scalar_lea.vmem [#allocation3], %s278
        %p280 = pneg %p187
        %p281 = pneg %p184
        %s282 = sand.u32 %s174, 1
        %s283 = scalar_lea.sflag [#allocation6], %s282
        %s284 = sand.u32 %s174, 1
        %s285 = smul.addr %s284, 2
        %s286 = scalar_lea.vmem [#allocation5], %s285
        %s287 = smul.u32 2, %s28
        %p288 = scmp.lt.s32.totalorder %s287, 1
        %s289 = scalar_select %p288, %s287, 1
        %s290 = smul.addr %s289, 8
        %s291 = scalar_lea.vmem %s0, %s290
        %s292 = smul.u32 2, %s28
        %s293 = smul.u32 2, %s28
        %p294 = scmp.lt.s32.totalorder %s27, 1
        %s295 = scalar_select %p294, %s27, 1
        %p296 = scmp.lt.s32.totalorder %s293, 1
        %s297 = scalar_select %p296, %s293, 1
        %s298 = smul.addr %s295, 2
        %s299 = sadd.s32 %s297, %s298
        %s300 = smul.addr %s299, 8
        %s301 = scalar_lea.vmem %s2, %s300
        %s302 = smul.u32 2, %s28
        %p303 = scmp.lt.s32.totalorder %s27, 1
        %s304 = scalar_select %p303, %s27, 1
        %s305 = smul.addr %s304, 4
        %s306 = smul.addr %s305, 8
        %s307 = scalar_lea.vmem %s3, %s306
        %s308 = smul.u32 2, %s28
        %p309 = scmp.eq.s32.totalorder %s28, 0
        // Predicated region
        $region37: #{tpu_custom_call.1} parent=35 // pred_check
          %p310 = pneg %p309
        $region38: #{tpu_custom_call.1} parent=35 // pred_check_branch
          %312 = sbr.rel (%p310) target = $region40
        $region39: #{tpu_custom_call.1} parent=35 // pred_region
          %v313 = vld [vmem:[%s307] sm:$0xff]
          %v314 = vld [vmem:[%s307 + $0x8] sm:$0xff]
          %v315 = vld [vmem:[%s307 + $0x10] sm:$0xff]
          %v316 = vld [vmem:[%s307 + $0x18] sm:$0xff]
          %v317 = vld [vmem:[%s1] sm:$0xff]
          %vm318 = vcmask 64512
          %v320 = vsel %vm318, %v313, 0
          %v323 = vsel %vm318, %v314, 0
          %v326 = vsel %vm318, %v315, 0
          %v329 = vsel %vm318, %v316, 0
          %331 = vmatprep.subr.mxu0 0.0
          %332 = vmatpush1.msra.mxu0 0.0
          %333 = vmatprep.subr.mxu0 0.0
          %334 = vmatpush1.msra.mxu0 0.0
          %335 = vmatprep.subr.mxu0 0.0
          %336 = vmatpush1.msra.mxu0 0.0
          %337 = vmatprep.subr.mxu0 0.0
          %338 = vmatpush1.msra.mxu0 0.0
          %339 = vmatprep.subr.mxu0 0.0
          %340 = vmatpush1.msra.mxu0 0.0
          %341 = vmatprep.subr.mxu0 0.0
          %342 = vmatpush1.msra.mxu0 0.0
          %343 = vmatprep.subr.mxu0 0.0
          %344 = vmatpush1.msra.mxu0 0.0
          %345 = vmatprep.subr.mxu0 0.0
          %346 = vmatpush1.msra.mxu0 0.0
          %347 = vmatprep.subr.mxu0 0.0
          %348 = vmatpush1.msra.mxu0 0.0
          %349 = vmatprep.subr.mxu0 0.0
          %350 = vmatpush1.msra.mxu0 0.0
          %351 = vmatprep.subr.mxu0 0.0
          %352 = vmatpush1.msra.mxu0 0.0
          %353 = vmatprep.subr.mxu0 0.0
          %354 = vmatpush1.msra.mxu0 0.0
          %355 = vmatprep.subr.mxu0 0.0
          %356 = vmatpush1.msra.mxu0 0.0
          %357 = vmatprep.subr.mxu0 0.0
          %358 = vmatpush1.msra.mxu0 0.0
          %359 = vmatprep.subr.mxu0 0.0
          %360 = vmatpush1.msra.mxu0 0.0
          %361 = vmatprep.subr.mxu0 0.0
          %362 = vmatpush1.msra.mxu0 %v317
          %363 = vmatprep.subr.mxu0 0.0
          %364 = vmatpush2.msra.mxu0 0.0
          %365 = vmatprep.subr.mxu0 0.0
          %366 = vmatpush2.msra.mxu0 0.0
          %367 = vmatprep.subr.mxu0 0.0
          %368 = vmatpush2.msra.mxu0 0.0
          %369 = vmatprep.subr.mxu0 0.0
          %370 = vmatpush2.msra.mxu0 0.0
          %371 = vmatprep.subr.mxu0 0.0
          %372 = vmatpush2.msra.mxu0 0.0
          %373 = vmatprep.subr.mxu0 0.0
          %374 = vmatpush2.msra.mxu0 0.0
          %375 = vmatprep.subr.mxu0 0.0
          %376 = vmatpush2.msra.mxu0 0.0
          %377 = vmatprep.subr.mxu0 0.0
          %378 = vmatpush2.msra.mxu0 0.0
          %379 = vmatprep.subr.mxu0 0.0
          %380 = vmatpush2.msra.mxu0 0.0
          %381 = vmatprep.subr.mxu0 0.0
          %382 = vmatpush2.msra.mxu0 0.0
          %383 = vmatprep.subr.mxu0 0.0
          %384 = vmatpush2.msra.mxu0 0.0
          %385 = vmatprep.subr.mxu0 0.0
          %386 = vmatpush2.msra.mxu0 0.0
          %387 = vmatprep.subr.mxu0 0.0
          %388 = vmatpush2.msra.mxu0 0.0
          %389 = vmatprep.subr.mxu0 0.0
          %390 = vmatpush2.msra.mxu0 0.0
          %391 = vmatprep.subr.mxu0 0.0
          %392 = vmatpush2.msra.mxu0 0.0
          %393 = vmatprep.subr.mxu0 0.0
          %394 = vmatpush2.msra.mxu0 0.0
          %395 = vmatprep.mubr.f32.mxu0 0.0
          %396 = vmatmul.mubr.f32.gmra.mxu0 %v320
          %v397 = vpop.f32.mrf.mxu0
          %v398 = vadd.f32 0.0, %v397
          %v399 = vpop.f32.mrf.mxu0
          %400 = vmatprep.mubr.f32.mxu0 0.0
          %401 = vmatmul.mubr.f32.gmra.mxu0 %v323
          %v402 = vpop.f32.mrf.mxu0
          %v403 = vadd.f32 0.0, %v402
          %v404 = vpop.f32.mrf.mxu0
          %405 = vmatprep.mubr.f32.mxu0 0.0
          %406 = vmatmul.mubr.f32.gmra.mxu0 %v326
          %v407 = vpop.f32.mrf.mxu0
          %v408 = vadd.f32 0.0, %v407
          %v409 = vpop.f32.mrf.mxu0
          %410 = vmatprep.mubr.f32.mxu0 0.0
          %411 = vmatmul.mubr.f32.gmra.mxu0 %v329
          %v412 = vpop.f32.mrf.mxu0
          %v413 = vadd.f32 0.0, %v412
          %v414 = vpop.f32.mrf.mxu0
          %415 = vdwg.mxu0
          %vm416 = vcmask 130048
          %417 = vst.msk [vmem:[#allocation2] sm:$0xff] %vm416, %v398
          %418 = vst.msk [vmem:[#allocation2 + $0x8] sm:$0xff] %vm416, %v403
          %419 = vst.msk [vmem:[#allocation2 + $0x10] sm:$0xff] %vm416, %v408
          %420 = vst.msk [vmem:[#allocation2 + $0x18] sm:$0xff] %vm416, %v413
        $region40: #{tpu_custom_call.1} parent=35 // pred_fallthru
          _
        %v421 = vld [vmem:[%s291] sm:$0xff]
        %v422 = vld [vmem:[%s291 + $0x8] sm:$0xff]
        %v423 = vld [vmem:[#allocation2] sm:$0xff]
        %v424 = vld [vmem:[#allocation2 + $0x8] sm:$0xff]
        %v425 = vld [vmem:[#allocation2 + $0x10] sm:$0xff]
        %v426 = vld [vmem:[#allocation2 + $0x18] sm:$0xff]
        %vm427 = vcmask 64512
        %v429 = vsel %vm427, %v421, 0
        %v432 = vsel %vm427, %v422, 0
        %434 = vmatprep.subr.mxu0 0.0
        %435 = vmatpush1.msra.mxu0 0.0
        %436 = vmatprep.subr.mxu0 0.0
        %437 = vmatpush1.msra.mxu0 0.0
        %438 = vmatprep.subr.mxu0 0.0
        %439 = vmatpush1.msra.mxu0 0.0
        %440 = vmatprep.subr.mxu0 0.0
        %441 = vmatpush1.msra.mxu0 0.0
        %442 = vmatprep.subr.mxu0 0.0
        %443 = vmatpush1.msra.mxu0 0.0
        %444 = vmatprep.subr.mxu0 0.0
        %445 = vmatpush1.msra.mxu0 0.0
        %446 = vmatprep.subr.mxu0 0.0
        %447 = vmatpush1.msra.mxu0 0.0
        %448 = vmatprep.subr.mxu0 0.0
        %449 = vmatpush1.msra.mxu0 0.0
        %450 = vmatprep.subr.mxu0 0.0
        %451 = vmatpush1.msra.mxu0 0.0
        %452 = vmatprep.subr.mxu0 0.0
        %453 = vmatpush1.msra.mxu0 0.0
        %454 = vmatprep.subr.mxu0 0.0
        %455 = vmatpush1.msra.mxu0 0.0
        %456 = vmatprep.subr.mxu0 0.0
        %457 = vmatpush1.msra.mxu0 0.0
        %458 = vmatprep.subr.mxu0 0.0
        %459 = vmatpush1.msra.mxu0 0.0
        %460 = vmatprep.subr.mxu0 0.0
        %461 = vmatpush1.msra.mxu0 0.0
        %462 = vmatprep.subr.mxu0 0.0
        %463 = vmatpush1.msra.mxu0 0.0
        %464 = vmatprep.subr.mxu0 0.0
        %465 = vmatpush1.msra.mxu0 %v423
        %466 = vmatprep.subr.mxu0 0.0
        %467 = vmatpush2.msra.mxu0 0.0
        %468 = vmatprep.subr.mxu0 0.0
        %469 = vmatpush2.msra.mxu0 0.0
        %470 = vmatprep.subr.mxu0 0.0
        %471 = vmatpush2.msra.mxu0 0.0
        %472 = vmatprep.subr.mxu0 0.0
        %473 = vmatpush2.msra.mxu0 0.0
        %474 = vmatprep.subr.mxu0 0.0
        %475 = vmatpush2.msra.mxu0 0.0
        %476 = vmatprep.subr.mxu0 0.0
        %477 = vmatpush2.msra.mxu0 0.0
        %478 = vmatprep.subr.mxu0 0.0
        %479 = vmatpush2.msra.mxu0 0.0
        %480 = vmatprep.subr.mxu0 0.0
        %481 = vmatpush2.msra.mxu0 0.0
        %482 = vmatprep.subr.mxu0 0.0
        %483 = vmatpush2.msra.mxu0 0.0
        %484 = vmatprep.subr.mxu0 0.0
        %485 = vmatpush2.msra.mxu0 0.0
        %486 = vmatprep.subr.mxu0 0.0
        %487 = vmatpush2.msra.mxu0 0.0
        %488 = vmatprep.subr.mxu0 0.0
        %489 = vmatpush2.msra.mxu0 0.0
        %490 = vmatprep.subr.mxu0 0.0
        %491 = vmatpush2.msra.mxu0 0.0
        %492 = vmatprep.subr.mxu0 0.0
        %493 = vmatpush2.msra.mxu0 0.0
        %494 = vmatprep.subr.mxu0 0.0
        %495 = vmatpush2.msra.mxu0 0.0
        %496 = vmatprep.subr.mxu0 0.0
        %497 = vmatpush2.msra.mxu0 0.0
        %498 = vmatprep.mubr.f32.mxu0 0.0
        %499 = vmatmul.mubr.f32.gmra.mxu0 %v429
        %v500 = vpop.f32.mrf.mxu0
        %v501 = vadd.f32 0.0, %v500
        %v502 = vpop.f32.mrf.mxu0
        %503 = vmatprep.mubr.f32.mxu0 0.0
        %504 = vmatmul.mubr.f32.gmra.mxu0 %v432
        %v505 = vpop.f32.mrf.mxu0
        %v506 = vadd.f32 0.0, %v505
        %v507 = vpop.f32.mrf.mxu0
        %508 = vdwg.mxu0
        %509 = vmatprep.subr.mxu0 0.0
        %510 = vmatpush1.msra.mxu0 0.0
        %511 = vmatprep.subr.mxu0 0.0
        %512 = vmatpush1.msra.mxu0 0.0
        %513 = vmatprep.subr.mxu0 0.0
        %514 = vmatpush1.msra.mxu0 0.0
        %515 = vmatprep.subr.mxu0 0.0
        %516 = vmatpush1.msra.mxu0 0.0
        %517 = vmatprep.subr.mxu0 0.0
        %518 = vmatpush1.msra.mxu0 0.0
        %519 = vmatprep.subr.mxu0 0.0
        %520 = vmatpush1.msra.mxu0 0.0
        %521 = vmatprep.subr.mxu0 0.0
        %522 = vmatpush1.msra.mxu0 0.0
        %523 = vmatprep.subr.mxu0 0.0
        %524 = vmatpush1.msra.mxu0 0.0
        %525 = vmatprep.subr.mxu0 0.0
        %526 = vmatpush1.msra.mxu0 0.0
        %527 = vmatprep.subr.mxu0 0.0
        %528 = vmatpush1.msra.mxu0 0.0
        %529 = vmatprep.subr.mxu0 0.0
        %530 = vmatpush1.msra.mxu0 0.0
        %531 = vmatprep.subr.mxu0 0.0
        %532 = vmatpush1.msra.mxu0 0.0
        %533 = vmatprep.subr.mxu0 0.0
        %534 = vmatpush1.msra.mxu0 0.0
        %535 = vmatprep.subr.mxu0 0.0
        %536 = vmatpush1.msra.mxu0 0.0
        %537 = vmatprep.subr.mxu0 0.0
        %538 = vmatpush1.msra.mxu0 0.0
        %539 = vmatprep.subr.mxu0 0.0
        %540 = vmatpush1.msra.mxu0 %v424
        %541 = vmatprep.subr.mxu0 0.0
        %542 = vmatpush2.msra.mxu0 0.0
        %543 = vmatprep.subr.mxu0 0.0
        %544 = vmatpush2.msra.mxu0 0.0
        %545 = vmatprep.subr.mxu0 0.0
        %546 = vmatpush2.msra.mxu0 0.0
        %547 = vmatprep.subr.mxu0 0.0
        %548 = vmatpush2.msra.mxu0 0.0
        %549 = vmatprep.subr.mxu0 0.0
        %550 = vmatpush2.msra.mxu0 0.0
        %551 = vmatprep.subr.mxu0 0.0
        %552 = vmatpush2.msra.mxu0 0.0
        %553 = vmatprep.subr.mxu0 0.0
        %554 = vmatpush2.msra.mxu0 0.0
        %555 = vmatprep.subr.mxu0 0.0
        %556 = vmatpush2.msra.mxu0 0.0
        %557 = vmatprep.subr.mxu0 0.0
        %558 = vmatpush2.msra.mxu0 0.0
        %559 = vmatprep.subr.mxu0 0.0
        %560 = vmatpush2.msra.mxu0 0.0
        %561 = vmatprep.subr.mxu0 0.0
        %562 = vmatpush2.msra.mxu0 0.0
        %563 = vmatprep.subr.mxu0 0.0
        %564 = vmatpush2.msra.mxu0 0.0
        %565 = vmatprep.subr.mxu0 0.0
        %566 = vmatpush2.msra.mxu0 0.0
        %567 = vmatprep.subr.mxu0 0.0
        %568 = vmatpush2.msra.mxu0 0.0
        %569 = vmatprep.subr.mxu0 0.0
        %570 = vmatpush2.msra.mxu0 0.0
        %571 = vmatprep.subr.mxu0 0.0
        %572 = vmatpush2.msra.mxu0 0.0
        %573 = vmatprep.mubr.f32.mxu0 0.0
        %574 = vmatmul.mubr.f32.gmra.mxu0 %v429
        %v575 = vpop.f32.mrf.mxu0
        %v576 = vadd.f32 0.0, %v575
        %v577 = vpop.f32.mrf.mxu0
        %578 = vmatprep.mubr.f32.mxu0 0.0
        %579 = vmatmul.mubr.f32.gmra.mxu0 %v432
        %v580 = vpop.f32.mrf.mxu0
        %v581 = vadd.f32 0.0, %v580
        %v582 = vpop.f32.mrf.mxu0
        %583 = vdwg.mxu0
        %584 = vmatprep.subr.mxu0 0.0
        %585 = vmatpush1.msra.mxu0 0.0
        %586 = vmatprep.subr.mxu0 0.0
        %587 = vmatpush1.msra.mxu0 0.0
        %588 = vmatprep.subr.mxu0 0.0
        %589 = vmatpush1.msra.mxu0 0.0
        %590 = vmatprep.subr.mxu0 0.0
        %591 = vmatpush1.msra.mxu0 0.0
        %592 = vmatprep.subr.mxu0 0.0
        %593 = vmatpush1.msra.mxu0 0.0
        %594 = vmatprep.subr.mxu0 0.0
        %595 = vmatpush1.msra.mxu0 0.0
        %596 = vmatprep.subr.mxu0 0.0
        %597 = vmatpush1.msra.mxu0 0.0
        %598 = vmatprep.subr.mxu0 0.0
        %599 = vmatpush1.msra.mxu0 0.0
        %600 = vmatprep.subr.mxu0 0.0
        %601 = vmatpush1.msra.mxu0 0.0
        %602 = vmatprep.subr.mxu0 0.0
        %603 = vmatpush1.msra.mxu0 0.0
        %604 = vmatprep.subr.mxu0 0.0
        %605 = vmatpush1.msra.mxu0 0.0
        %606 = vmatprep.subr.mxu0 0.0
        %607 = vmatpush1.msra.mxu0 0.0
        %608 = vmatprep.subr.mxu0 0.0
        %609 = vmatpush1.msra.mxu0 0.0
        %610 = vmatprep.subr.mxu0 0.0
        %611 = vmatpush1.msra.mxu0 0.0
        %612 = vmatprep.subr.mxu0 0.0
        %613 = vmatpush1.msra.mxu0 0.0
        %614 = vmatprep.subr.mxu0 0.0
        %615 = vmatpush1.msra.mxu0 %v425
        %616 = vmatprep.subr.mxu0 0.0
        %617 = vmatpush2.msra.mxu0 0.0
        %618 = vmatprep.subr.mxu0 0.0
        %619 = vmatpush2.msra.mxu0 0.0
        %620 = vmatprep.subr.mxu0 0.0
        %621 = vmatpush2.msra.mxu0 0.0
        %622 = vmatprep.subr.mxu0 0.0
        %623 = vmatpush2.msra.mxu0 0.0
        %624 = vmatprep.subr.mxu0 0.0
        %625 = vmatpush2.msra.mxu0 0.0
        %626 = vmatprep.subr.mxu0 0.0
        %627 = vmatpush2.msra.mxu0 0.0
        %628 = vmatprep.subr.mxu0 0.0
        %629 = vmatpush2.msra.mxu0 0.0
        %630 = vmatprep.subr.mxu0 0.0
        %631 = vmatpush2.msra.mxu0 0.0
        %632 = vmatprep.subr.mxu0 0.0
        %633 = vmatpush2.msra.mxu0 0.0
        %634 = vmatprep.subr.mxu0 0.0
        %635 = vmatpush2.msra.mxu0 0.0
        %636 = vmatprep.subr.mxu0 0.0
        %637 = vmatpush2.msra.mxu0 0.0
        %638 = vmatprep.subr.mxu0 0.0
        %639 = vmatpush2.msra.mxu0 0.0
        %640 = vmatprep.subr.mxu0 0.0
        %641 = vmatpush2.msra.mxu0 0.0
        %642 = vmatprep.subr.mxu0 0.0
        %643 = vmatpush2.msra.mxu0 0.0
        %644 = vmatprep.subr.mxu0 0.0
        %645 = vmatpush2.msra.mxu0 0.0
        %646 = vmatprep.subr.mxu0 0.0
        %647 = vmatpush2.msra.mxu0 0.0
        %648 = vmatprep.mubr.f32.mxu0 0.0
        %649 = vmatmul.mubr.f32.gmra.mxu0 %v429
        %v650 = vpop.f32.mrf.mxu0
        %v651 = vadd.f32 0.0, %v650
        %v652 = vpop.f32.mrf.mxu0
        %653 = vmatprep.mubr.f32.mxu0 0.0
        %654 = vmatmul.mubr.f32.gmra.mxu0 %v432
        %v655 = vpop.f32.mrf.mxu0
        %v656 = vadd.f32 0.0, %v655
        %v657 = vpop.f32.mrf.mxu0
        %658 = vdwg.mxu0
        %659 = vmatprep.subr.mxu0 0.0
        %660 = vmatpush1.msra.mxu0 0.0
        %661 = vmatprep.subr.mxu0 0.0
        %662 = vmatpush1.msra.mxu0 0.0
        %663 = vmatprep.subr.mxu0 0.0
        %664 = vmatpush1.msra.mxu0 0.0
        %665 = vmatprep.subr.mxu0 0.0
        %666 = vmatpush1.msra.mxu0 0.0
        %667 = vmatprep.subr.mxu0 0.0
        %668 = vmatpush1.msra.mxu0 0.0
        %669 = vmatprep.subr.mxu0 0.0
        %670 = vmatpush1.msra.mxu0 0.0
        %671 = vmatprep.subr.mxu0 0.0
        %672 = vmatpush1.msra.mxu0 0.0
        %673 = vmatprep.subr.mxu0 0.0
        %674 = vmatpush1.msra.mxu0 0.0
        %675 = vmatprep.subr.mxu0 0.0
        %676 = vmatpush1.msra.mxu0 0.0
        %677 = vmatprep.subr.mxu0 0.0
        %678 = vmatpush1.msra.mxu0 0.0
        %679 = vmatprep.subr.mxu0 0.0
        %680 = vmatpush1.msra.mxu0 0.0
        %681 = vmatprep.subr.mxu0 0.0
        %682 = vmatpush1.msra.mxu0 0.0
        %683 = vmatprep.subr.mxu0 0.0
        %684 = vmatpush1.msra.mxu0 0.0
        %685 = vmatprep.subr.mxu0 0.0
        %686 = vmatpush1.msra.mxu0 0.0
        %687 = vmatprep.subr.mxu0 0.0
        %688 = vmatpush1.msra.mxu0 0.0
        %689 = vmatprep.subr.mxu0 0.0
        %690 = vmatpush1.msra.mxu0 %v426
        %691 = vmatprep.subr.mxu0 0.0
        %692 = vmatpush2.msra.mxu0 0.0
        %693 = vmatprep.subr.mxu0 0.0
        %694 = vmatpush2.msra.mxu0 0.0
        %695 = vmatprep.subr.mxu0 0.0
        %696 = vmatpush2.msra.mxu0 0.0
        %697 = vmatprep.subr.mxu0 0.0
        %698 = vmatpush2.msra.mxu0 0.0
        %699 = vmatprep.subr.mxu0 0.0
        %700 = vmatpush2.msra.mxu0 0.0
        %701 = vmatprep.subr.mxu0 0.0
        %702 = vmatpush2.msra.mxu0 0.0
        %703 = vmatprep.subr.mxu0 0.0
        %704 = vmatpush2.msra.mxu0 0.0
        %705 = vmatprep.subr.mxu0 0.0
        %706 = vmatpush2.msra.mxu0 0.0
        %707 = vmatprep.subr.mxu0 0.0
        %708 = vmatpush2.msra.mxu0 0.0
        %709 = vmatprep.subr.mxu0 0.0
        %710 = vmatpush2.msra.mxu0 0.0
        %711 = vmatprep.subr.mxu0 0.0
        %712 = vmatpush2.msra.mxu0 0.0
        %713 = vmatprep.subr.mxu0 0.0
        %714 = vmatpush2.msra.mxu0 0.0
        %715 = vmatprep.subr.mxu0 0.0
        %716 = vmatpush2.msra.mxu0 0.0
        %717 = vmatprep.subr.mxu0 0.0
        %718 = vmatpush2.msra.mxu0 0.0
        %719 = vmatprep.subr.mxu0 0.0
        %720 = vmatpush2.msra.mxu0 0.0
        %721 = vmatprep.subr.mxu0 0.0
        %722 = vmatpush2.msra.mxu0 0.0
        %723 = vmatprep.mubr.f32.mxu0 0.0
        %724 = vmatmul.mubr.f32.gmra.mxu0 %v429
        %v725 = vpop.f32.mrf.mxu0
        %v726 = vadd.f32 0.0, %v725
        %v727 = vpop.f32.mrf.mxu0
        %728 = vmatprep.mubr.f32.mxu0 0.0
        %729 = vmatmul.mubr.f32.gmra.mxu0 %v432
        %v730 = vpop.f32.mrf.mxu0
        %v731 = vadd.f32 0.0, %v730
        %v732 = vpop.f32.mrf.mxu0
        %733 = vdwg.mxu0
        %v734 = vld [vmem:[%s301] sm:$0xff]
        %v735 = vld [vmem:[%s301 + $0x8] sm:$0xff]
        %vm736 = vcmp.ne.s32.totalorder %v734, 255
        %vm737 = vcmp.ne.s32.totalorder %v735, 255
        %v738 = vsel %vm736, 1, 0
        %v739 = vsel %vm737, 1, 0
        %v740 = vcvt.s32.f32 %v738
        %v741 = vcvt.s32.f32 %v739
        %vm742 = vcmp.eq.s32.totalorder %v734, 0
        %vm743 = vcmp.eq.s32.totalorder %v735, 0
        %vm744 = vcmp.eq.s32.totalorder %v734, 1
        %vm745 = vcmp.eq.s32.totalorder %v735, 1
        %vm746 = vcmp.eq.s32.totalorder %v734, 2
        %vm747 = vcmp.eq.s32.totalorder %v735, 2
        %vm748 = vcmp.eq.s32.totalorder %v734, 3
        %vm749 = vcmp.eq.s32.totalorder %v735, 3
        %v750 = vsel %vm742, 1, 0
        %v751 = vsel %vm743, 1, 0
        %v752 = vsel %vm744, 1, 0
        %v753 = vsel %vm745, 1, 0
        %v754 = vsel %vm746, 1, 0
        %v755 = vsel %vm747, 1, 0
        %v756 = vsel %vm748, 1, 0
        %v757 = vsel %vm749, 1, 0
        %v758 = vcvt.s32.f32 %v750
        %v759 = vcvt.s32.f32 %v751
        %v760 = vcvt.s32.f32 %v752
        %v761 = vcvt.s32.f32 %v753
        %v762 = vcvt.s32.f32 %v754
        %v763 = vcvt.s32.f32 %v755
        %v764 = vcvt.s32.f32 %v756
        %v765 = vcvt.s32.f32 %v757
        %vm766 = vcmask 130048
        %v767 = vsel %vm766, %v501, -inf
        %v768 = vsel %vm766, %v576, -inf
        %v769 = vsel %vm766, %v651, -inf
        %v770 = vmax.f32 %v767, %v769
        %v771 = vsel %vm766, %v726, -inf
        %v772 = vmax.f32 %v768, %v771
        %v773 = vmax.f32 %v770, %v772
        %v774 = vsel %vm766, %v506, -inf
        %v775 = vsel %vm766, %v581, -inf
        %v776 = vsel %vm766, %v656, -inf
        %v777 = vmax.f32 %v774, %v776
        %v778 = vsel %vm766, %v731, -inf
        %v779 = vmax.f32 %v775, %v778
        %v780 = vmax.f32 %v777, %v779
        %v781 = vsub.f32 %v501, %v773
        %v782 = vsub.f32 %v506, %v780
        %v783 = vsub.f32 %v576, %v773
        %v784 = vsub.f32 %v581, %v780
        %v785 = vsub.f32 %v651, %v773
        %v786 = vsub.f32 %v656, %v780
        %v787 = vsub.f32 %v726, %v773
        %v788 = vsub.f32 %v731, %v780
        %v789 = vmul.f32 %v781, 1.442695
        %v790 = vpow.pop %v789
        %v791 = vmul.f32 %v782, 1.442695
        %v792 = vpow.pop %v791
        %v793 = vmul.f32 %v783, 1.442695
        %v794 = vpow.pop %v793
        %v795 = vmul.f32 %v784, 1.442695
        %v796 = vpow.pop %v795
        %v797 = vmul.f32 %v785, 1.442695
        %v798 = vpow.pop %v797
        %v799 = vmul.f32 %v786, 1.442695
        %v800 = vpow.pop %v799
        %v801 = vmul.f32 %v787, 1.442695
        %v802 = vpow.pop %v801
        %v803 = vmul.f32 %v788, 1.442695
        %v804 = vpow.pop %v803
        %v805 = vsel %vm766, %v790, 0.0
        %v806 = vsel %vm766, %v794, 0.0
        %v807 = vadd.f32 %v805, %v806
        %v808 = vsel %vm766, %v798, 0.0
        %v809 = vadd.f32 %v807, %v808
        %v810 = vsel %vm766, %v802, 0.0
        %v811 = vadd.f32 %v809, %v810
        %v812 = vsel %vm766, %v792, 0.0
        %v813 = vsel %vm766, %v796, 0.0
        %v814 = vadd.f32 %v812, %v813
        %v815 = vsel %vm766, %v800, 0.0
        %v816 = vadd.f32 %v814, %v815
        %v817 = vsel %vm766, %v804, 0.0
        %v818 = vadd.f32 %v816, %v817
        %v819 = vmul.f32 %v501, %v758
        %v820 = vmul.f32 %v506, %v759
        %v821 = vmul.f32 %v576, %v760
        %v822 = vmul.f32 %v581, %v761
        %v823 = vmul.f32 %v651, %v762
        %v824 = vmul.f32 %v656, %v763
        %v825 = vmul.f32 %v726, %v764
        %v826 = vmul.f32 %v731, %v765
        %v827 = vsel %vm766, %v819, 0.0
        %v828 = vsel %vm766, %v821, 0.0
        %v829 = vadd.f32 %v827, %v828
        %v830 = vsel %vm766, %v823, 0.0
        %v831 = vadd.f32 %v829, %v830
        %v832 = vsel %vm766, %v825, 0.0
        %v833 = vadd.f32 %v831, %v832
        %v834 = vsel %vm766, %v820, 0.0
        %v835 = vsel %vm766, %v822, 0.0
        %v836 = vadd.f32 %v834, %v835
        %v837 = vsel %vm766, %v824, 0.0
        %v838 = vadd.f32 %v836, %v837
        %v839 = vsel %vm766, %v826, 0.0
        %v840 = vadd.f32 %v838, %v839
        %v841 = vrcp.pop %v811
        %v842 = vrcp.pop %v818
        %v843 = vlog2.pop %v811
        %v844 = vmul.f32 %v843, 0.6931472
        %v845 = vlog2.pop %v818
        %v846 = vmul.f32 %v845, 0.6931472
        %v847 = vadd.f32 %v773, %v844
        %v848 = vadd.f32 %v780, %v846
        %v849 = vsub.f32 %v847, %v833
        %v850 = vsub.f32 %v848, %v840
        %v851 = vmul.f32 %v849, %v740
        %v852 = vmul.f32 %v850, %v741
        %v853 = vsel %vm766, %v851, 0.0
        %v854 = vsel %vm766, %v852, 0.0
        %v855 = vadd.f32 %v853, %v854
        %v856 = vrot.slane %v855, 4
        %v857 = vadd.f32 %v855, %v856
        %v858 = vrot.slane %v857, 2
        %v859 = vadd.f32 %v857, %v858
        %v860 = vrot.slane %v859, 1
        %v861 = vadd.f32 %v859, %v860
        %v862 = vsel %vm766, %v740, 0.0
        %v863 = vsel %vm766, %v741, 0.0
        %v864 = vadd.f32 %v862, %v863
        %v865 = vrot.slane %v864, 4
        %v866 = vadd.f32 %v864, %v865
        %v867 = vrot.slane %v866, 2
        %v868 = vadd.f32 %v866, %v867
        %v869 = vrot.slane %v868, 1
        %v870 = vadd.f32 %v868, %v869
        %vm871 = vcmask 1040384
        %v872 = vsel %vm871, %v861, %v870
        %vm873 = vcmask 123904
        %874 = vst.msk [vmem:[%s286] sm:$0x3] %vm873, %v872
        %v875 = vmul.f32 %v790, %v841
        %v876 = vmul.f32 %v792, %v842
        %v877 = vmul.f32 %v794, %v841
        %v878 = vmul.f32 %v796, %v842
        %v879 = vmul.f32 %v798, %v841
        %v880 = vmul.f32 %v800, %v842
        %v881 = vmul.f32 %v802, %v841
        %v882 = vmul.f32 %v804, %v842
        %v883 = vsub.f32 %v758, %v875
        %v884 = vsub.f32 %v759, %v876
        %v885 = vsub.f32 %v760, %v877
        %v886 = vsub.f32 %v761, %v878
        %v887 = vsub.f32 %v762, %v879
        %v888 = vsub.f32 %v763, %v880
        %v889 = vsub.f32 %v764, %v881
        %v890 = vsub.f32 %v765, %v882
        %v891 = vand.u32 2147483647, %v883
        %v892 = vand.u32 2147483647, %v884
        %v893 = vand.u32 2147483647, %v885
        %v894 = vand.u32 2147483647, %v886
        %v895 = vand.u32 2147483647, %v887
        %v896 = vand.u32 2147483647, %v888
        %v897 = vand.u32 2147483647, %v889
        %v898 = vand.u32 2147483647, %v890
        %v899 = vmul.f32 %v891, %v740
        %v900 = vmul.f32 %v892, %v741
        %v901 = vmul.f32 %v893, %v740
        %v902 = vmul.f32 %v894, %v741
        %v903 = vmul.f32 %v895, %v740
        %v904 = vmul.f32 %v896, %v741
        %v905 = vmul.f32 %v897, %v740
        %v906 = vmul.f32 %v898, %v741
        %907 = vst.msk [vmem:[%s279] sm:$0xff] %vm766, %v899
        %908 = vst.msk [vmem:[%s279 + $0x8] sm:$0xff] %vm766, %v900
        %909 = vst.msk [vmem:[%s279 + $0x10] sm:$0xff] %vm766, %v901
        %910 = vst.msk [vmem:[%s279 + $0x18] sm:$0xff] %vm766, %v902
        %911 = vst.msk [vmem:[%s279 + $0x20] sm:$0xff] %vm766, %v903
        %912 = vst.msk [vmem:[%s279 + $0x28] sm:$0xff] %vm766, %v904
        %913 = vst.msk [vmem:[%s279 + $0x30] sm:$0xff] %vm766, %v905
        %914 = vst.msk [vmem:[%s279 + $0x38] sm:$0xff] %vm766, %v906
        %s915 = sand.u32 %s146, 1
        %s916 = scalar_lea.sflag [#allocation4], %s915
        %s917 = sand.u32 %s146, 1
        %s918 = smul.addr %s917, 64
        %s919 = scalar_lea.vmem [#allocation3], %s918
        %s920 = sand.u32 %s174, 1
        %s921 = scalar_lea.sflag [#allocation6], %s920
        %s922 = sand.u32 %s174, 1
        %s923 = smul.addr %s922, 2
        %s924 = scalar_lea.vmem [#allocation5], %s923
        // Predicated region
        $region41: #{tpu_custom_call.1} parent=35 // pred_check
          %p925 = pneg %p156
        $region42: #{tpu_custom_call.1} parent=35 // pred_check_branch
          %927 = sbr.rel (%p925) target = $region44
        $region43: #{tpu_custom_call.1} parent=35 // pred_region
          %s928 = smul.u32 2, %s28
          %s930 = ssub.s32 1024, 1024
          %931 = vsyncadd %s916, %s930
          %s932 = smul.addr %s27, 8
          %s933 = sadd.s32 %s928, %s932
          %s934 = smul.addr %s933, 128
          %s935 = scalar_lea.hbm %s4, %s934
          %s936 = sshll.u32 %s919, 4
          %s937 = int_to_ptr.vmem [resolvable:$true] %s936
          %942 = dma.vmem_to_hbm [thread:$0]  %s937, 1024, %s935, %s916, 128, 128, 8
        $region44: #{tpu_custom_call.1} parent=35 // pred_fallthru
          _
        // Predicated region
        $region45: #{tpu_custom_call.1} parent=35 // pred_check
          %p943 = pneg %p184
        $region46: #{tpu_custom_call.1} parent=35 // pred_check_branch
          %945 = sbr.rel (%p943) target = $region48
        $region47: #{tpu_custom_call.1} parent=35 // pred_region
          %s947 = ssub.s32 32, 32
          %948 = vsyncadd %s921, %s947
          %s949 = sadd.s32 %s28, %s27
          %s950 = smul.addr %s949, 32
          %s951 = scalar_lea.hbm %s5, %s950
          %s953 = sshll.u32 %s924, 4
          %s954 = int_to_ptr.vmem [resolvable:$true] %s953
          %956 = dma.vmem_to_hbm [thread:$0]  %s954, 32, %s951, %s921
        $region48: #{tpu_custom_call.1} parent=35 // pred_fallthru
          _
      $region36: #{tpu_custom_call.1} parent=5 // pred_fallthru
        _
      %p957 = scmp.le.s32.totalorder 2, %s18
      // Predicated region
      $region49: #{tpu_custom_call.1} parent=5 // pred_check
        %p958 = pneg %p957
      $region50: #{tpu_custom_call.1} parent=5 // pred_check_branch
        %960 = sbr.rel (%p958) target = $region52
      $region51: #{tpu_custom_call.1} parent=5 // pred_region
        %s961 = ssub.s32 %s18, 2
        // Predicated region
        $region53: #{tpu_custom_call.1} parent=51 // pred_check
          %p962 = pneg %p162
        $region54: #{tpu_custom_call.1} parent=51 // pred_check_branch
          %964 = sbr.rel (%p962) target = $region56
        $region55: #{tpu_custom_call.1} parent=51 // pred_region
          %s965 = sand.u32 %s147, 1
          %s966 = scalar_lea.sflag [#allocation4], %s965
          %s967 = sand.u32 %s147, 1
          %s968 = smul.addr %s967, 64
          %s969 = scalar_lea.vmem [#allocation3], %s968
          %970 = dma.done %s966, 1024
        $region56: #{tpu_custom_call.1} parent=51 // pred_fallthru
          _
        // Predicated region
        $region57: #{tpu_custom_call.1} parent=51 // pred_check
          %p971 = pneg %p190
        $region58: #{tpu_custom_call.1} parent=51 // pred_check_branch
          %973 = sbr.rel (%p971) target = $region60
        $region59: #{tpu_custom_call.1} parent=51 // pred_region
          %s974 = sand.u32 %s175, 1
          %s975 = scalar_lea.sflag [#allocation6], %s974
          %s976 = sand.u32 %s175, 1
          %s977 = smul.addr %s976, 2
          %s978 = scalar_lea.vmem [#allocation5], %s977
          %979 = dma.done %s975, 32
        $region60: #{tpu_custom_call.1} parent=51 // pred_fallthru
          _
      $region52: #{tpu_custom_call.1} parent=5 // pred_fallthru
        _
    $region6: #{tpu_custom_call.1} parent=1 // loop_footer
      %s22 = sadd.s32 1, %s18
    $region7: #{tpu_custom_call.1} parent=1 // loop_footer_branch
      %17 = sbr.rel target = $region3
    $region8: #{tpu_custom_call.1} parent=1 // loop_exit
      _
    %980 = vsyncpa [#allocation4], 1
    %s981 = scalar_lea.sflag [#allocation4], 1
    %982 = vsyncpa %s981, 1
    %983 = vsyncpa [#allocation6], 1
    %s984 = scalar_lea.sflag [#allocation6], 1
    %985 = vsyncpa %s984, 1

</llo_original>
